<compile_context>
chip_gen: v7x
topology: tpu7x:2x2x1
jax: 0.10.0
libtpu: 0.0.40
codegen_flags: <defaults>
</compile_context>

<pallas_src>
import jax
import jax.numpy as jnp
from jax.experimental import pallas as pl
from jax.experimental.pallas import tpu as pltpu

NUM_TOPICS = 80
BERT_DIM = 768
HIDDEN_DIM = 768
NUM_CLASSES = 2
LANE = 128  # folded-weight lane padding (MXU operand width); output stays narrow


def tbert_fused_kernel(bert_ref, topic_ref, wa_ref, wb_ref, b_ref, out_ref):
    # Single folded linear: logits = bert @ W_eff[:768] + topic @ W_eff[768:] + b_eff
    # bf16 MXU operands, f32 accumulation.  Inputs may already be bf16 (astype is
    # then a no-op), so an upstream bf16 BERT encoder is accepted directly.
    acc = jnp.dot(bert_ref[...].astype(jnp.bfloat16), wa_ref[...],
                  preferred_element_type=jnp.float32)
    acc += jnp.dot(topic_ref[...].astype(jnp.bfloat16), wb_ref[...],
                   preferred_element_type=jnp.float32)
    acc += b_ref[...]                                   # (1, 128) broadcasts over rows
    out_ref[...] = acc[:, :NUM_CLASSES].astype(out_ref.dtype)   # narrow store (B, 2)


def _round_up(x, m):
    return (x + m - 1) // m * m


def _pick_tile(batch):
    # Sublane-aligned, capped at 1024, and sized so grid >= 2 whenever possible
    # (v7x megacore splits the "parallel" batch axis across its two TensorCores).
    return max(8, min(1024, _round_up(-(-batch // 2), 8)))


def fold_params(params):
    """One-time fold of the two Linear layers (inference only).  Call once, reuse.

    params: w1 (848,768), b1 (768,), w2 (768,2), b2 (2,)  — stored as (in, out).
    """
    # TODO(synk): Dropout(p=0.2) is identity at inference; the folding below is
    # only valid in eval mode (no training-mode masking implemented).
    hi = jax.lax.Precision.HIGHEST
    w_eff = jnp.dot(params["w1"], params["w2"], precision=hi)                 # (848, 2)
    b_eff = jnp.dot(params["b1"], params["w2"], precision=hi) + params["b2"]  # (2,)

    w_padded = jnp.zeros((BERT_DIM + NUM_TOPICS, LANE), jnp.float32)
    w_padded = w_padded.at[:, :NUM_CLASSES].set(w_eff)
    bias = jnp.zeros((1, LANE), jnp.float32).at[0, :NUM_CLASSES].set(b_eff)
    return {
        "w_a": w_padded[:BERT_DIM, :].astype(jnp.bfloat16),   # (768, 128) * bert
        "w_b": w_padded[BERT_DIM:, :].astype(jnp.bfloat16),   # (80, 128)  * topic
        "bias": bias,                                          # (1, 128) f32
    }


def tbert_forward(bert_embedding, topic_distribution, folded):
    """Inference forward.  `folded` comes from fold_params() (pre-computed once)."""
    B = bert_embedding.shape[0]
    tile_b = _pick_tile(B)
    grid = (pl.cdiv(B, tile_b),)   # ragged last block handled by the pipeline; no jnp.pad

    cost = pl.CostEstimate(
        flops=2 * B * (BERT_DIM + NUM_TOPICS) * LANE,
        transcendentals=0,
        bytes_accessed=(bert_embedding.size * bert_embedding.dtype.itemsize
                        + topic_distribution.size * topic_distribution.dtype.itemsize
                        + 2 * (folded["w_a"].size + folded["w_b"].size)
                        + 4 * folded["bias"].size
                        + 4 * B * NUM_CLASSES),
    )

    return pl.pallas_call(
        tbert_fused_kernel,
        out_shape=jax.ShapeDtypeStruct((B, NUM_CLASSES), jnp.float32),
        grid=grid,
        in_specs=[
            pl.BlockSpec((tile_b, BERT_DIM), lambda i: (i, 0)),     # activations: tiled
            pl.BlockSpec((tile_b, NUM_TOPICS), lambda i: (i, 0)),   # activations: tiled
            pl.BlockSpec((BERT_DIM, LANE), lambda i: (0, 0)),       # weights: VMEM-resident
            pl.BlockSpec((NUM_TOPICS, LANE), lambda i: (0, 0)),     # weights: VMEM-resident
            pl.BlockSpec((1, LANE), lambda i: (0, 0)),              # bias:    VMEM-resident
        ],
        out_specs=pl.BlockSpec((tile_b, NUM_CLASSES), lambda i: (i, 0)),
        compiler_params=pltpu.CompilerParams(
            dimension_semantics=("parallel",)),  # shards tiles across v7x's 2 TCs
        cost_estimate=cost,
    )(bert_embedding, topic_distribution, folded["w_a"], folded["w_b"], folded["bias"])


def init_params(key):
    """Deterministic parameter init matching nn.Linear shapes (stored as (in, out))."""
    k1, k2, k3, k4 = jax.random.split(key, 4)
    in1 = BERT_DIM + NUM_TOPICS
    bound1 = 1.0 / jnp.sqrt(in1)
    bound2 = 1.0 / jnp.sqrt(HIDDEN_DIM)
    return {
        "w1": jax.random.uniform(k1, (in1, HIDDEN_DIM), jnp.float32, -bound1, bound1),
        "b1": jax.random.uniform(k2, (HIDDEN_DIM,), jnp.float32, -bound1, bound1),
        "w2": jax.random.uniform(k3, (HIDDEN_DIM, NUM_CLASSES), jnp.float32, -bound2, bound2),
        "b2": jax.random.uniform(k4, (NUM_CLASSES,), jnp.float32, -bound2, bound2),
    }


def _reference_logits(bert_embedding, topic_distribution, params):
    # Plain JAX, same math as the PyTorch eval forward, forced to true-f32 matmuls.
    hi = jax.lax.Precision.HIGHEST
    combined = jnp.concatenate([bert_embedding, topic_distribution], axis=1)
    hidden = jnp.dot(combined, params["w1"], precision=hi) + params["b1"]
    return jnp.dot(hidden, params["w2"], precision=hi) + params["b2"]


if __name__ == "__main__":
    key = jax.random.PRNGKey(0)
    kp, kb, kt = jax.random.split(key, 3)

    params = init_params(kp)
    folded = fold_params(params)          # one-time fold, off the per-call path
    fwd = jax.jit(tbert_forward)

    # Two batch sizes: exact tile (grid=1) and ragged multi-tile (grid=2, boundary block).
    for B in (8, 12):
        kb_i, kt_i = jax.random.fold_in(kb, B), jax.random.fold_in(kt, B)
        bert_embedding = jax.random.normal(kb_i, (B, BERT_DIM), jnp.float32)
        topic_logits = jax.random.normal(kt_i, (B, NUM_TOPICS), jnp.float32)
        topic_distribution = jax.nn.softmax(topic_logits, axis=-1)

        logits = jax.block_until_ready(fwd(bert_embedding, topic_distribution, folded))
        assert logits.shape == (B, NUM_CLASSES)

        logits_ref = _reference_logits(bert_embedding, topic_distribution, params)
        # bf16 MXU operands (f32 accumulate) + folded accumulation order vs the
        # true-f32 two-matmul reference -> loosened tolerance.
        assert jnp.allclose(logits, logits_ref, atol=2e-2, rtol=2e-2), (
            B, jnp.max(jnp.abs(logits - logits_ref)))

    print("KERNEL_OK")
</pallas_src>

<mosaic_0001>
module attributes {stable_mosaic.version = 11 : i64} {
  func.func @tbert_fused_kernel(%arg0: i32, %arg1: memref<8x768xf32, #tpu.memory_space<vmem>>, %arg2: memref<8x80xf32, #tpu.memory_space<vmem>>, %arg3: memref<768x128xbf16, #tpu.memory_space<vmem>>, %arg4: memref<80x128xbf16, #tpu.memory_space<vmem>>, %arg5: memref<1x128xf32, #tpu.memory_space<vmem>>, %arg6: memref<8x2xf32, #tpu.memory_space<vmem>>) attributes {dimension_semantics = [#tpu.dimension_semantics<parallel>], iteration_bounds = array<i64: 1>, scalar_prefetch = 0 : i64, scratch_operands = 0 : i64, tpu.core_type = #tpu.core_type<tc>, window_params = [{transform_indices = @transform_0, window_bounds = array<i64: 8, 768>}, {transform_indices = @transform_1, window_bounds = array<i64: 8, 80>}, {pipeline_mode = #tpu.pipeline_mode<synchronous>, transform_indices = @transform_2, window_bounds = array<i64: 768, 128>}, {pipeline_mode = #tpu.pipeline_mode<synchronous>, transform_indices = @transform_3, window_bounds = array<i64: 80, 128>}, {pipeline_mode = #tpu.pipeline_mode<synchronous>, transform_indices = @transform_4, window_bounds = array<i64: 1, 128>}, {transform_indices = @transform_5, window_bounds = array<i64: 8, 2>}]} {
    %c0 = arith.constant 0 : index
    %c0_0 = arith.constant 0 : index
    %0 = vector.load %arg1[%c0, %c0_0] : memref<8x768xf32, #tpu.memory_space<vmem>>, vector<8x768xf32>
    %1 = arith.truncf %0 : vector<8x768xf32> to vector<8x768xbf16>
    %c0_1 = arith.constant 0 : index
    %c0_2 = arith.constant 0 : index
    %2 = vector.load %arg3[%c0_1, %c0_2] : memref<768x128xbf16, #tpu.memory_space<vmem>>, vector<768x128xbf16>
    %cst = arith.constant dense<0.000000e+00> : vector<8x128xf32>
    %3 = tpu.matmul %1, %2, %cst {dimension_numbers = #tpu.dot_dimension_numbers<[1], [0], [0], [1], [0, 0, 1, 1], [], []>} : vector<8x768xbf16>, vector<768x128xbf16>, vector<8x128xf32> -> vector<8x128xf32>
    %c0_3 = arith.constant 0 : index
    %c0_4 = arith.constant 0 : index
    %4 = vector.load %arg2[%c0_3, %c0_4] : memref<8x80xf32, #tpu.memory_space<vmem>>, vector<8x80xf32>
    %5 = arith.truncf %4 : vector<8x80xf32> to vector<8x80xbf16>
    %c0_5 = arith.constant 0 : index
    %c0_6 = arith.constant 0 : index
    %6 = vector.load %arg4[%c0_5, %c0_6] : memref<80x128xbf16, #tpu.memory_space<vmem>>, vector<80x128xbf16>
    %cst_7 = arith.constant dense<0.000000e+00> : vector<8x128xf32>
    %7 = tpu.matmul %5, %6, %cst_7 {dimension_numbers = #tpu.dot_dimension_numbers<[1], [0], [0], [1], [0, 0, 1, 1], [], []>} : vector<8x80xbf16>, vector<80x128xbf16>, vector<8x128xf32> -> vector<8x128xf32>
    %8 = arith.addf %3, %7 : vector<8x128xf32>
    %c0_8 = arith.constant 0 : index
    %c0_9 = arith.constant 0 : index
    %9 = vector.load %arg5[%c0_8, %c0_9] : memref<1x128xf32, #tpu.memory_space<vmem>>, vector<1x128xf32>
    %10 = vector.broadcast %9 : vector<1x128xf32> to vector<8x128xf32>
    %11 = arith.addf %8, %10 : vector<8x128xf32>
    %12 = vector.extract_strided_slice %11 {offsets = [0, 0], sizes = [8, 2], strides = [1, 1]} : vector<8x128xf32> to vector<8x2xf32>
    %c0_10 = arith.constant 0 : index
    %c0_11 = arith.constant 0 : index
    %13 = vector.load %arg6[%c0_10, %c0_11] : memref<8x2xf32, #tpu.memory_space<vmem>>, vector<8x2xf32>
    tpu.vector_store %arg6[%c0_10, %c0_11], %12 {strides = array<i32>} : memref<8x2xf32, #tpu.memory_space<vmem>>, vector<8x2xf32>,
    return
  }
  func.func @transform_0(%arg0: i32) -> (i32, i32) {
    %c0_i32 = arith.constant 0 : i32
    %c0_i32_0 = arith.constant 0 : i32
    return %arg0, %c0_i32 : i32, i32
  }
  func.func @transform_1(%arg0: i32) -> (i32, i32) {
    %c0_i32 = arith.constant 0 : i32
    %c0_i32_0 = arith.constant 0 : i32
    return %arg0, %c0_i32 : i32, i32
  }
  func.func @transform_2(%arg0: i32) -> (i32, i32) {
    %c0_i32 = arith.constant 0 : i32
    %c0_i32_0 = arith.constant 0 : i32
    %c0_i32_1 = arith.constant 0 : i32
    return %c0_i32, %c0_i32_0 : i32, i32
  }
  func.func @transform_3(%arg0: i32) -> (i32, i32) {
    %c0_i32 = arith.constant 0 : i32
    %c0_i32_0 = arith.constant 0 : i32
    %c0_i32_1 = arith.constant 0 : i32
    return %c0_i32, %c0_i32_0 : i32, i32
  }
  func.func @transform_4(%arg0: i32) -> (i32, i32) {
    %c0_i32 = arith.constant 0 : i32
    %c0_i32_0 = arith.constant 0 : i32
    %c0_i32_1 = arith.constant 0 : i32
    return %c0_i32, %c0_i32_0 : i32, i32
  }
  func.func @transform_5(%arg0: i32) -> (i32, i32) {
    %c0_i32 = arith.constant 0 : i32
    %c0_i32_0 = arith.constant 0 : i32
    return %arg0, %c0_i32 : i32, i32
  }
}

</mosaic_0001>

<llo_original>
// kernel: tbert_forward.1
$region0: #{tbert_forward.1}
  #allocation0 [shape = 'u32[]', space=smem, size = 0x4, offset = 0x4, fixed_abs, tag = 'smem constant byte address 0x4 - core index']
  #allocation1 [shape = 'u32[144,128]{1,0:T(1,128)}', space=vmem, size = 0x12000, scoped, tag = 'internal scratch']
  %s0 = inlined_call_operand.hbm [shape: f32[8,768], index: 0, kind: input, shape index: {}]
  %s1 = inlined_call_operand.hbm [shape: f32[8,80], index: 1, kind: input, shape index: {}]
  %s2 = inlined_call_operand.hbm [shape: bf16[768,128], index: 2, kind: input, shape index: {}]
  %s3 = inlined_call_operand.hbm [shape: bf16[80,128], index: 3, kind: input, shape index: {}]
  %s4 = inlined_call_operand.vmem [shape: f32[1,128], index: 4, kind: input, shape index: {}]
  %s5 = inlined_call_operand.vmem [shape: f32[8,2], index: 5, kind: output, shape index: {}]
  %s6 = sld [smem:[#allocation0]]
  $region46: #{tbert_forward.1} parent=0
    _
  %s8 = ssub.s32 1, %s6
  %s9 = scalar_select 0, %s8, %s6
  $region1: #{tbert_forward.1} parent=0
    #allocation2 [shape = 'u8[24576]{0}', space=vmem, size = 0x6000, scoped, tag = 'input window, operand 0, single buffered']
    #allocation3 [shape = 's32[1]{0}', space=sflag, size = 0x4, scoped, tag = 'scoped memory for tbert_forward.1']
    #allocation4 [shape = 'u8[4096]{0}', space=vmem, size = 0x1000, scoped, tag = 'input window, operand 1, single buffered']
    #allocation5 [shape = 's32[1]{0}', space=sflag, size = 0x4, scoped, tag = 'scoped memory for tbert_forward.1']
    #allocation6 [shape = 'u8[196608]{0}', space=vmem, size = 0x30000, scoped, tag = 'input window, operand 2, single buffered']
    #allocation7 [shape = 'u8[20480]{0}', space=vmem, size = 0x5000, scoped, tag = 'input window, operand 3, single buffered']
    #allocation8 [shape = 's32[1]{0}', space=sflag, size = 0x4, scoped, tag = 'scoped memory for tbert_forward.1']
    %10 = vsyncpa [#allocation3], 0
    %11 = vsyncpa [#allocation5], 0
    %12 = vsyncpa [#allocation8], 0
    // Predicated region
    $region2: #{tbert_forward.1} parent=1 // pred_check
      _
    $region3: #{tbert_forward.1} parent=1 // pred_check_branch
      %14 = sbr.rel (0) target = $region5
    $region4: #{tbert_forward.1} parent=1 // pred_region
      %s16 = ssub.s32 768, 768
      %17 = vsyncadd [#allocation3], %s16
      %s19 = sshll.u32 [#allocation2], 4
      %s20 = int_to_ptr.vmem [resolvable:$true] %s19
      %22 = dma.hbm_to_vmem [thread:$0]  %s0, 768, %s20, [#allocation3]
    $region5: #{tbert_forward.1} parent=1 // pred_fallthru
      _
    // Predicated region
    $region6: #{tbert_forward.1} parent=1 // pred_check
      _
    $region7: #{tbert_forward.1} parent=1 // pred_check_branch
      %24 = sbr.rel (0) target = $region9
    $region8: #{tbert_forward.1} parent=1 // pred_region
      %s26 = ssub.s32 128, 128
      %27 = vsyncadd [#allocation5], %s26
      %s29 = sshll.u32 [#allocation4], 4
      %s30 = int_to_ptr.vmem [resolvable:$true] %s29
      %32 = dma.hbm_to_vmem [thread:$0]  %s1, 128, %s30, [#allocation5]
    $region9: #{tbert_forward.1} parent=1 // pred_fallthru
      _
    // Predicated region
    $region10: #{tbert_forward.1} parent=1 // pred_check
      _
    $region11: #{tbert_forward.1} parent=1 // pred_check_branch
      %34 = sbr.rel (0) target = $region13
    $region12: #{tbert_forward.1} parent=1 // pred_region
      %s36 = ssub.s32 6144, 6144
      %37 = vsyncadd [#allocation5], %s36
      %s38 = sshll.u32 [#allocation6], 4
      %s39 = int_to_ptr.vmem [resolvable:$true] %s38
      %44 = dma.hbm_to_vmem [thread:$0]  %s2, 6144, %s39, [#allocation5], 64, 64, 4
    $region13: #{tbert_forward.1} parent=1 // pred_fallthru
      _
    // Predicated region
    $region14: #{tbert_forward.1} parent=1 // pred_check
      _
    $region15: #{tbert_forward.1} parent=1 // pred_check_branch
      %46 = sbr.rel (0) target = $region17
    $region16: #{tbert_forward.1} parent=1 // pred_region
      %s48 = ssub.s32 640, 640
      %49 = vsyncadd [#allocation8], %s48
      %s50 = sshll.u32 [#allocation7], 4
      %s51 = int_to_ptr.vmem [resolvable:$true] %s50
      %56 = dma.hbm_to_vmem [thread:$0]  %s3, 640, %s51, [#allocation8], 64, 64, 4
    $region17: #{tbert_forward.1} parent=1 // pred_fallthru
      _
    // Predicated region
    $region18: #{tbert_forward.1} parent=1 // pred_check
      _
    $region19: #{tbert_forward.1} parent=1 // pred_check_branch
      %58 = sbr.rel (0) target = $region21
    $region20: #{tbert_forward.1} parent=1 // pred_region
      _
    $region21: #{tbert_forward.1} parent=1 // pred_fallthru
      _
    // Predicated region
    $region22: #{tbert_forward.1} parent=1 // pred_check
      _
    $region23: #{tbert_forward.1} parent=1 // pred_check_branch
      %60 = sbr.rel (0) target = $region25
    $region24: #{tbert_forward.1} parent=1 // pred_region
      %61 = dma.done [#allocation3], 768
    $region25: #{tbert_forward.1} parent=1 // pred_fallthru
      _
    // Predicated region
    $region26: #{tbert_forward.1} parent=1 // pred_check
      _
    $region27: #{tbert_forward.1} parent=1 // pred_check_branch
      %63 = sbr.rel (0) target = $region29
    $region28: #{tbert_forward.1} parent=1 // pred_region
      %64 = dma.done [#allocation5], 128
    $region29: #{tbert_forward.1} parent=1 // pred_fallthru
      _
    // Predicated region
    $region30: #{tbert_forward.1} parent=1 // pred_check
      _
    $region31: #{tbert_forward.1} parent=1 // pred_check_branch
      %66 = sbr.rel (0) target = $region33
    $region32: #{tbert_forward.1} parent=1 // pred_region
      %67 = dma.done [#allocation5], 6144
    $region33: #{tbert_forward.1} parent=1 // pred_fallthru
      _
    // Predicated region
    $region34: #{tbert_forward.1} parent=1 // pred_check
      _
    $region35: #{tbert_forward.1} parent=1 // pred_check_branch
      %69 = sbr.rel (0) target = $region37
    $region36: #{tbert_forward.1} parent=1 // pred_region
      %70 = dma.done [#allocation8], 640
    $region37: #{tbert_forward.1} parent=1 // pred_fallthru
      _
    %v72 = vld [vmem:[#allocation2] sm:$0xff]
    %v73 = vld [vmem:[#allocation2 + $0x8] sm:$0xff]
    %v74 = vld [vmem:[#allocation2 + $0x10] sm:$0xff]
    %v75 = vld [vmem:[#allocation2 + $0x18] sm:$0xff]
    %v76 = vld [vmem:[#allocation2 + $0x20] sm:$0xff]
    %v77 = vld [vmem:[#allocation2 + $0x28] sm:$0xff]
    %v78 = vpack.c.bf16 %v72, %v72
    %v79 = vpack.c.bf16 %v73, %v73
    %v80 = vpack.c.bf16 %v74, %v74
    %v81 = vpack.c.bf16 %v75, %v75
    %v82 = vpack.c.bf16 %v76, %v76
    %v83 = vpack.c.bf16 %v77, %v77
    %v84 = vld [vmem:[#allocation6] sm:$0xf]
    %v85 = vld [vmem:[#allocation6 + $0x4] sm:$0xf]
    %v86 = vld [vmem:[#allocation6 + $0x8] sm:$0xf]
    %v87 = vld [vmem:[#allocation6 + $0xc] sm:$0xf]
    %v88 = vld [vmem:[#allocation6 + $0x10] sm:$0xf]
    %v89 = vld [vmem:[#allocation6 + $0x14] sm:$0xf]
    %v90 = vld [vmem:[#allocation6 + $0x18] sm:$0xf]
    %v91 = vld [vmem:[#allocation6 + $0x1c] sm:$0xf]
    %v92 = vld [vmem:[#allocation6 + $0x20] sm:$0xf]
    %v93 = vld [vmem:[#allocation6 + $0x24] sm:$0xf]
    %v94 = vld [vmem:[#allocation6 + $0x28] sm:$0xf]
    %v95 = vld [vmem:[#allocation6 + $0x2c] sm:$0xf]
    %v96 = vld [vmem:[#allocation6 + $0x30] sm:$0xf]
    %v97 = vld [vmem:[#allocation6 + $0x34] sm:$0xf]
    %v98 = vld [vmem:[#allocation6 + $0x38] sm:$0xf]
    %v99 = vld [vmem:[#allocation6 + $0x3c] sm:$0xf]
    %v100 = vld [vmem:[#allocation6 + $0x40] sm:$0xf]
    %v101 = vld [vmem:[#allocation6 + $0x44] sm:$0xf]
    %v102 = vld [vmem:[#allocation6 + $0x48] sm:$0xf]
    %v103 = vld [vmem:[#allocation6 + $0x4c] sm:$0xf]
    %v104 = vld [vmem:[#allocation6 + $0x50] sm:$0xf]
    %v105 = vld [vmem:[#allocation6 + $0x54] sm:$0xf]
    %v106 = vld [vmem:[#allocation6 + $0x58] sm:$0xf]
    %v107 = vld [vmem:[#allocation6 + $0x5c] sm:$0xf]
    %v108 = vld [vmem:[#allocation6 + $0x60] sm:$0xf]
    %v109 = vld [vmem:[#allocation6 + $0x64] sm:$0xf]
    %v110 = vld [vmem:[#allocation6 + $0x68] sm:$0xf]
    %v111 = vld [vmem:[#allocation6 + $0x6c] sm:$0xf]
    %v112 = vld [vmem:[#allocation6 + $0x70] sm:$0xf]
    %v113 = vld [vmem:[#allocation6 + $0x74] sm:$0xf]
    %v114 = vld [vmem:[#allocation6 + $0x78] sm:$0xf]
    %v115 = vld [vmem:[#allocation6 + $0x7c] sm:$0xf]
    %v116 = vld [vmem:[#allocation6 + $0x80] sm:$0xf]
    %v117 = vld [vmem:[#allocation6 + $0x84] sm:$0xf]
    %v118 = vld [vmem:[#allocation6 + $0x88] sm:$0xf]
    %v119 = vld [vmem:[#allocation6 + $0x8c] sm:$0xf]
    %v120 = vld [vmem:[#allocation6 + $0x90] sm:$0xf]
    %v121 = vld [vmem:[#allocation6 + $0x94] sm:$0xf]
    %v122 = vld [vmem:[#allocation6 + $0x98] sm:$0xf]
    %v123 = vld [vmem:[#allocation6 + $0x9c] sm:$0xf]
    %v124 = vld [vmem:[#allocation6 + $0xa0] sm:$0xf]
    %v125 = vld [vmem:[#allocation6 + $0xa4] sm:$0xf]
    %v126 = vld [vmem:[#allocation6 + $0xa8] sm:$0xf]
    %v127 = vld [vmem:[#allocation6 + $0xac] sm:$0xf]
    %v128 = vld [vmem:[#allocation6 + $0xb0] sm:$0xf]
    %v129 = vld [vmem:[#allocation6 + $0xb4] sm:$0xf]
    %v130 = vld [vmem:[#allocation6 + $0xb8] sm:$0xf]
    %v131 = vld [vmem:[#allocation6 + $0xbc] sm:$0xf]
    %v132 = vld [vmem:[#allocation6 + $0xc0] sm:$0xf]
    %v133 = vld [vmem:[#allocation6 + $0xc4] sm:$0xf]
    %v134 = vld [vmem:[#allocation6 + $0xc8] sm:$0xf]
    %v135 = vld [vmem:[#allocation6 + $0xcc] sm:$0xf]
    %v136 = vld [vmem:[#allocation6 + $0xd0] sm:$0xf]
    %v137 = vld [vmem:[#allocation6 + $0xd4] sm:$0xf]
    %v138 = vld [vmem:[#allocation6 + $0xd8] sm:$0xf]
    %v139 = vld [vmem:[#allocation6 + $0xdc] sm:$0xf]
    %v140 = vld [vmem:[#allocation6 + $0xe0] sm:$0xf]
    %v141 = vld [vmem:[#allocation6 + $0xe4] sm:$0xf]
    %v142 = vld [vmem:[#allocation6 + $0xe8] sm:$0xf]
    %v143 = vld [vmem:[#allocation6 + $0xec] sm:$0xf]
    %v144 = vld [vmem:[#allocation6 + $0xf0] sm:$0xf]
    %v145 = vld [vmem:[#allocation6 + $0xf4] sm:$0xf]
    %v146 = vld [vmem:[#allocation6 + $0xf8] sm:$0xf]
    %v147 = vld [vmem:[#allocation6 + $0xfc] sm:$0xf]
    %v148 = vld [vmem:[#allocation6 + $0x100] sm:$0xf]
    %v149 = vld [vmem:[#allocation6 + $0x104] sm:$0xf]
    %v150 = vld [vmem:[#allocation6 + $0x108] sm:$0xf]
    %v151 = vld [vmem:[#allocation6 + $0x10c] sm:$0xf]
    %v152 = vld [vmem:[#allocation6 + $0x110] sm:$0xf]
    %v153 = vld [vmem:[#allocation6 + $0x114] sm:$0xf]
    %v154 = vld [vmem:[#allocation6 + $0x118] sm:$0xf]
    %v155 = vld [vmem:[#allocation6 + $0x11c] sm:$0xf]
    %v156 = vld [vmem:[#allocation6 + $0x120] sm:$0xf]
    %v157 = vld [vmem:[#allocation6 + $0x124] sm:$0xf]
    %v158 = vld [vmem:[#allocation6 + $0x128] sm:$0xf]
    %v159 = vld [vmem:[#allocation6 + $0x12c] sm:$0xf]
    %v160 = vld [vmem:[#allocation6 + $0x130] sm:$0xf]
    %v161 = vld [vmem:[#allocation6 + $0x134] sm:$0xf]
    %v162 = vld [vmem:[#allocation6 + $0x138] sm:$0xf]
    %v163 = vld [vmem:[#allocation6 + $0x13c] sm:$0xf]
    %v164 = vld [vmem:[#allocation6 + $0x140] sm:$0xf]
    %v165 = vld [vmem:[#allocation6 + $0x144] sm:$0xf]
    %v166 = vld [vmem:[#allocation6 + $0x148] sm:$0xf]
    %v167 = vld [vmem:[#allocation6 + $0x14c] sm:$0xf]
    %v168 = vld [vmem:[#allocation6 + $0x150] sm:$0xf]
    %v169 = vld [vmem:[#allocation6 + $0x154] sm:$0xf]
    %v170 = vld [vmem:[#allocation6 + $0x158] sm:$0xf]
    %v171 = vld [vmem:[#allocation6 + $0x15c] sm:$0xf]
    %v172 = vld [vmem:[#allocation6 + $0x160] sm:$0xf]
    %v173 = vld [vmem:[#allocation6 + $0x164] sm:$0xf]
    %v174 = vld [vmem:[#allocation6 + $0x168] sm:$0xf]
    %v175 = vld [vmem:[#allocation6 + $0x16c] sm:$0xf]
    %v176 = vld [vmem:[#allocation6 + $0x170] sm:$0xf]
    %v177 = vld [vmem:[#allocation6 + $0x174] sm:$0xf]
    %v178 = vld [vmem:[#allocation6 + $0x178] sm:$0xf]
    %v179 = vld [vmem:[#allocation6 + $0x17c] sm:$0xf]
    %v180 = vld [vmem:[#allocation4] sm:$0xff]
    %v181 = vpack.c.bf16 %v180, %v180
    %v182 = vld [vmem:[#allocation7] sm:$0xf]
    %v183 = vld [vmem:[#allocation7 + $0x4] sm:$0xf]
    %v184 = vld [vmem:[#allocation7 + $0x8] sm:$0xf]
    %v185 = vld [vmem:[#allocation7 + $0xc] sm:$0xf]
    %v186 = vld [vmem:[#allocation7 + $0x10] sm:$0xf]
    %v187 = vld [vmem:[#allocation7 + $0x14] sm:$0xf]
    %v188 = vld [vmem:[#allocation7 + $0x18] sm:$0xf]
    %v189 = vld [vmem:[#allocation7 + $0x1c] sm:$0xf]
    %v190 = vld [vmem:[#allocation7 + $0x20] sm:$0xf]
    %v191 = vld [vmem:[#allocation7 + $0x24] sm:$0xf]
    %v202 = vunpack.c.l.b16 %v182
    %v203 = vunpack.c.l.b16 %v183
    %v204 = vunpack.c.l.b16 %v184
    %v205 = vunpack.c.l.b16 %v185
    %v206 = vunpack.c.l.b16 %v186
    %v207 = vunpack.c.l.b16 %v187
    %v208 = vunpack.c.l.b16 %v188
    %v209 = vunpack.c.l.b16 %v189
    %v210 = vunpack.c.l.b16 %v190
    %v211 = vunpack.c.l.b16 %v191
    %v212 = vpack.c.b16 %v203, %v202
    %v213 = vpack.c.b16 %v205, %v204
    %v214 = vpack.c.b16 %v207, %v206
    %v215 = vpack.c.b16 %v209, %v208
    %v216 = vpack.c.b16 %v211, %v210
    %vm222 = vcmask 654336
    %v224 = vsel %vm222, %v181, 0
    %226 = vmatprep.subr.bf16.mxu0 0
    %227 = vmatpush1.bf16.msra.mxu0 %v212
    %228 = vmatprep.subr.bf16.mxu0 0
    %229 = vmatpush1.bf16.msra.mxu0 %v213
    %230 = vmatprep.subr.bf16.mxu0 0
    %231 = vmatpush1.bf16.msra.mxu0 %v214
    %232 = vmatprep.subr.bf16.mxu0 0
    %233 = vmatpush1.bf16.msra.mxu0 %v215
    %234 = vmatprep.subr.bf16.mxu0 0
    %235 = vmatpush1.bf16.msra.mxu0 %v216
    %236 = vmatprep.subr.bf16.mxu0 0
    %237 = vmatpush1.bf16.msra.mxu0 0
    %238 = vmatprep.subr.bf16.mxu0 0
    %239 = vmatpush1.bf16.msra.mxu0 0
    %240 = vmatprep.subr.bf16.mxu0 0
    %241 = vmatpush1.bf16.msra.mxu0 0
    %242 = vmatprep.subr.bf16.mxu0 0
    %243 = vmatpush1.bf16.msra.mxu0 0
    %244 = vmatprep.subr.bf16.mxu0 0
    %245 = vmatpush1.bf16.msra.mxu0 0
    %246 = vmatprep.subr.bf16.mxu0 0
    %247 = vmatpush1.bf16.msra.mxu0 0
    %248 = vmatprep.subr.bf16.mxu0 0
    %249 = vmatpush1.bf16.msra.mxu0 0
    %250 = vmatprep.subr.bf16.mxu0 0
    %251 = vmatpush1.bf16.msra.mxu0 0
    %252 = vmatprep.subr.bf16.mxu0 0
    %253 = vmatpush1.bf16.msra.mxu0 0
    %254 = vmatprep.subr.bf16.mxu0 0
    %255 = vmatpush1.bf16.msra.mxu0 0
    %256 = vmatprep.subr.bf16.mxu0 0
    %257 = vmatpush1.bf16.msra.mxu0 0
    %258 = vmatprep.mubr.bf16.mxu0 0
    %259 = vmatmul.mubr.bf16.gmra.mrb[0].mxu0 %v224
    %v260 = vpop.f32.mrb[0].mxu0
    %v261 = vadd.f32 0.0, %v260
    %v262 = vpop.f32.mrb[0].mxu0
    %v263 = vpop.f32.mrb[0].mxu0
    %v264 = vpop.f32.mrb[0].mxu0
    %265 = vdwg.mxu0
    %v362 = vunpack.c.l.b16 %v84
    %v363 = vunpack.c.l.b16 %v85
    %v364 = vunpack.c.l.b16 %v86
    %v365 = vunpack.c.l.b16 %v87
    %v366 = vunpack.c.l.b16 %v88
    %v367 = vunpack.c.l.b16 %v89
    %v368 = vunpack.c.l.b16 %v90
    %v369 = vunpack.c.l.b16 %v91
    %v370 = vunpack.c.l.b16 %v92
    %v371 = vunpack.c.l.b16 %v93
    %v372 = vunpack.c.l.b16 %v94
    %v373 = vunpack.c.l.b16 %v95
    %v374 = vunpack.c.l.b16 %v96
    %v375 = vunpack.c.l.b16 %v97
    %v376 = vunpack.c.l.b16 %v98
    %v377 = vunpack.c.l.b16 %v99
    %v378 = vunpack.c.l.b16 %v100
    %v379 = vunpack.c.l.b16 %v101
    %v380 = vunpack.c.l.b16 %v102
    %v381 = vunpack.c.l.b16 %v103
    %v382 = vunpack.c.l.b16 %v104
    %v383 = vunpack.c.l.b16 %v105
    %v384 = vunpack.c.l.b16 %v106
    %v385 = vunpack.c.l.b16 %v107
    %v386 = vunpack.c.l.b16 %v108
    %v387 = vunpack.c.l.b16 %v109
    %v388 = vunpack.c.l.b16 %v110
    %v389 = vunpack.c.l.b16 %v111
    %v390 = vunpack.c.l.b16 %v112
    %v391 = vunpack.c.l.b16 %v113
    %v392 = vunpack.c.l.b16 %v114
    %v393 = vunpack.c.l.b16 %v115
    %v394 = vunpack.c.l.b16 %v116
    %v395 = vunpack.c.l.b16 %v117
    %v396 = vunpack.c.l.b16 %v118
    %v397 = vunpack.c.l.b16 %v119
    %v398 = vunpack.c.l.b16 %v120
    %v399 = vunpack.c.l.b16 %v121
    %v400 = vunpack.c.l.b16 %v122
    %v401 = vunpack.c.l.b16 %v123
    %v402 = vunpack.c.l.b16 %v124
    %v403 = vunpack.c.l.b16 %v125
    %v404 = vunpack.c.l.b16 %v126
    %v405 = vunpack.c.l.b16 %v127
    %v406 = vunpack.c.l.b16 %v128
    %v407 = vunpack.c.l.b16 %v129
    %v408 = vunpack.c.l.b16 %v130
    %v409 = vunpack.c.l.b16 %v131
    %v410 = vunpack.c.l.b16 %v132
    %v411 = vunpack.c.l.b16 %v133
    %v412 = vunpack.c.l.b16 %v134
    %v413 = vunpack.c.l.b16 %v135
    %v414 = vunpack.c.l.b16 %v136
    %v415 = vunpack.c.l.b16 %v137
    %v416 = vunpack.c.l.b16 %v138
    %v417 = vunpack.c.l.b16 %v139
    %v418 = vunpack.c.l.b16 %v140
    %v419 = vunpack.c.l.b16 %v141
    %v420 = vunpack.c.l.b16 %v142
    %v421 = vunpack.c.l.b16 %v143
    %v422 = vunpack.c.l.b16 %v144
    %v423 = vunpack.c.l.b16 %v145
    %v424 = vunpack.c.l.b16 %v146
    %v425 = vunpack.c.l.b16 %v147
    %v426 = vunpack.c.l.b16 %v148
    %v427 = vunpack.c.l.b16 %v149
    %v428 = vunpack.c.l.b16 %v150
    %v429 = vunpack.c.l.b16 %v151
    %v430 = vunpack.c.l.b16 %v152
    %v431 = vunpack.c.l.b16 %v153
    %v432 = vunpack.c.l.b16 %v154
    %v433 = vunpack.c.l.b16 %v155
    %v434 = vunpack.c.l.b16 %v156
    %v435 = vunpack.c.l.b16 %v157
    %v436 = vunpack.c.l.b16 %v158
    %v437 = vunpack.c.l.b16 %v159
    %v438 = vunpack.c.l.b16 %v160
    %v439 = vunpack.c.l.b16 %v161
    %v440 = vunpack.c.l.b16 %v162
    %v441 = vunpack.c.l.b16 %v163
    %v442 = vunpack.c.l.b16 %v164
    %v443 = vunpack.c.l.b16 %v165
    %v444 = vunpack.c.l.b16 %v166
    %v445 = vunpack.c.l.b16 %v167
    %v446 = vunpack.c.l.b16 %v168
    %v447 = vunpack.c.l.b16 %v169
    %v448 = vunpack.c.l.b16 %v170
    %v449 = vunpack.c.l.b16 %v171
    %v450 = vunpack.c.l.b16 %v172
    %v451 = vunpack.c.l.b16 %v173
    %v452 = vunpack.c.l.b16 %v174
    %v453 = vunpack.c.l.b16 %v175
    %v454 = vunpack.c.l.b16 %v176
    %v455 = vunpack.c.l.b16 %v177
    %v456 = vunpack.c.l.b16 %v178
    %v457 = vunpack.c.l.b16 %v179
    %v458 = vpack.c.b16 %v363, %v362
    %v459 = vpack.c.b16 %v365, %v364
    %v460 = vpack.c.b16 %v367, %v366
    %v461 = vpack.c.b16 %v369, %v368
    %v462 = vpack.c.b16 %v371, %v370
    %v463 = vpack.c.b16 %v373, %v372
    %v464 = vpack.c.b16 %v375, %v374
    %v465 = vpack.c.b16 %v377, %v376
    %v466 = vpack.c.b16 %v379, %v378
    %v467 = vpack.c.b16 %v381, %v380
    %v468 = vpack.c.b16 %v383, %v382
    %v469 = vpack.c.b16 %v385, %v384
    %v470 = vpack.c.b16 %v387, %v386
    %v471 = vpack.c.b16 %v389, %v388
    %v472 = vpack.c.b16 %v391, %v390
    %v473 = vpack.c.b16 %v393, %v392
    %v474 = vpack.c.b16 %v395, %v394
    %v475 = vpack.c.b16 %v397, %v396
    %v476 = vpack.c.b16 %v399, %v398
    %v477 = vpack.c.b16 %v401, %v400
    %v478 = vpack.c.b16 %v403, %v402
    %v479 = vpack.c.b16 %v405, %v404
    %v480 = vpack.c.b16 %v407, %v406
    %v481 = vpack.c.b16 %v409, %v408
    %v482 = vpack.c.b16 %v411, %v410
    %v483 = vpack.c.b16 %v413, %v412
    %v484 = vpack.c.b16 %v415, %v414
    %v485 = vpack.c.b16 %v417, %v416
    %v486 = vpack.c.b16 %v419, %v418
    %v487 = vpack.c.b16 %v421, %v420
    %v488 = vpack.c.b16 %v423, %v422
    %v489 = vpack.c.b16 %v425, %v424
    %v490 = vpack.c.b16 %v427, %v426
    %v491 = vpack.c.b16 %v429, %v428
    %v492 = vpack.c.b16 %v431, %v430
    %v493 = vpack.c.b16 %v433, %v432
    %v494 = vpack.c.b16 %v435, %v434
    %v495 = vpack.c.b16 %v437, %v436
    %v496 = vpack.c.b16 %v439, %v438
    %v497 = vpack.c.b16 %v441, %v440
    %v498 = vpack.c.b16 %v443, %v442
    %v499 = vpack.c.b16 %v445, %v444
    %v500 = vpack.c.b16 %v447, %v446
    %v501 = vpack.c.b16 %v449, %v448
    %v502 = vpack.c.b16 %v451, %v450
    %v503 = vpack.c.b16 %v453, %v452
    %v504 = vpack.c.b16 %v455, %v454
    %v505 = vpack.c.b16 %v457, %v456
    %554 = vmatprep.subr.bf16.mxu0 0
    %555 = vmatpush1.bf16.msra.mxu0 %v458
    %556 = vmatprep.subr.bf16.mxu0 0
    %557 = vmatpush1.bf16.msra.mxu0 %v459
    %558 = vmatprep.subr.bf16.mxu0 0
    %559 = vmatpush1.bf16.msra.mxu0 %v460
    %560 = vmatprep.subr.bf16.mxu0 0
    %561 = vmatpush1.bf16.msra.mxu0 %v461
    %562 = vmatprep.subr.bf16.mxu0 0
    %563 = vmatpush1.bf16.msra.mxu0 %v462
    %564 = vmatprep.subr.bf16.mxu0 0
    %565 = vmatpush1.bf16.msra.mxu0 %v463
    %566 = vmatprep.subr.bf16.mxu0 0
    %567 = vmatpush1.bf16.msra.mxu0 %v464
    %568 = vmatprep.subr.bf16.mxu0 0
    %569 = vmatpush1.bf16.msra.mxu0 %v465
    %570 = vmatprep.subr.bf16.mxu0 0
    %571 = vmatpush1.bf16.msra.mxu0 %v466
    %572 = vmatprep.subr.bf16.mxu0 0
    %573 = vmatpush1.bf16.msra.mxu0 %v467
    %574 = vmatprep.subr.bf16.mxu0 0
    %575 = vmatpush1.bf16.msra.mxu0 %v468
    %576 = vmatprep.subr.bf16.mxu0 0
    %577 = vmatpush1.bf16.msra.mxu0 %v469
    %578 = vmatprep.subr.bf16.mxu0 0
    %579 = vmatpush1.bf16.msra.mxu0 %v470
    %580 = vmatprep.subr.bf16.mxu0 0
    %581 = vmatpush1.bf16.msra.mxu0 %v471
    %582 = vmatprep.subr.bf16.mxu0 0
    %583 = vmatpush1.bf16.msra.mxu0 %v472
    %584 = vmatprep.subr.bf16.mxu0 0
    %585 = vmatpush1.bf16.msra.mxu0 %v473
    %586 = vmatprep.mubr.bf16.mxu0 %v79
    %587 = vmatmul.mubr.bf16.gmra.mrb[0].mxu0 %v78
    %v588 = vpop.f32.mrb[0].mxu0
    %v589 = vadd.f32 %v261, %v588
    %v590 = vpop.f32.mrb[0].mxu0
    %v591 = vpop.f32.mrb[0].mxu0
    %v592 = vpop.f32.mrb[0].mxu0
    %593 = vdwg.mxu0
    %594 = vmatprep.subr.bf16.mxu0 0
    %595 = vmatpush1.bf16.msra.mxu0 %v474
    %596 = vmatprep.subr.bf16.mxu0 0
    %597 = vmatpush1.bf16.msra.mxu0 %v475
    %598 = vmatprep.subr.bf16.mxu0 0
    %599 = vmatpush1.bf16.msra.mxu0 %v476
    %600 = vmatprep.subr.bf16.mxu0 0
    %601 = vmatpush1.bf16.msra.mxu0 %v477
    %602 = vmatprep.subr.bf16.mxu0 0
    %603 = vmatpush1.bf16.msra.mxu0 %v478
    %604 = vmatprep.subr.bf16.mxu0 0
    %605 = vmatpush1.bf16.msra.mxu0 %v479
    %606 = vmatprep.subr.bf16.mxu0 0
    %607 = vmatpush1.bf16.msra.mxu0 %v480
    %608 = vmatprep.subr.bf16.mxu0 0
    %609 = vmatpush1.bf16.msra.mxu0 %v481
    %610 = vmatprep.subr.bf16.mxu0 0
    %611 = vmatpush1.bf16.msra.mxu0 %v482
    %612 = vmatprep.subr.bf16.mxu0 0
    %613 = vmatpush1.bf16.msra.mxu0 %v483
    %614 = vmatprep.subr.bf16.mxu0 0
    %615 = vmatpush1.bf16.msra.mxu0 %v484
    %616 = vmatprep.subr.bf16.mxu0 0
    %617 = vmatpush1.bf16.msra.mxu0 %v485
    %618 = vmatprep.subr.bf16.mxu0 0
    %619 = vmatpush1.bf16.msra.mxu0 %v486
    %620 = vmatprep.subr.bf16.mxu0 0
    %621 = vmatpush1.bf16.msra.mxu0 %v487
    %622 = vmatprep.subr.bf16.mxu0 0
    %623 = vmatpush1.bf16.msra.mxu0 %v488
    %624 = vmatprep.subr.bf16.mxu0 0
    %625 = vmatpush1.bf16.msra.mxu0 %v489
    %626 = vmatprep.mubr.bf16.mxu0 %v81
    %627 = vmatmul.mubr.bf16.gmra.mrb[0].mxu0 %v80
    %v628 = vpop.f32.mrb[0].mxu0
    %v629 = vadd.f32 %v589, %v628
    %v630 = vpop.f32.mrb[0].mxu0
    %v631 = vpop.f32.mrb[0].mxu0
    %v632 = vpop.f32.mrb[0].mxu0
    %633 = vdwg.mxu0
    %634 = vmatprep.subr.bf16.mxu0 0
    %635 = vmatpush1.bf16.msra.mxu0 %v490
    %636 = vmatprep.subr.bf16.mxu0 0
    %637 = vmatpush1.bf16.msra.mxu0 %v491
    %638 = vmatprep.subr.bf16.mxu0 0
    %639 = vmatpush1.bf16.msra.mxu0 %v492
    %640 = vmatprep.subr.bf16.mxu0 0
    %641 = vmatpush1.bf16.msra.mxu0 %v493
    %642 = vmatprep.subr.bf16.mxu0 0
    %643 = vmatpush1.bf16.msra.mxu0 %v494
    %644 = vmatprep.subr.bf16.mxu0 0
    %645 = vmatpush1.bf16.msra.mxu0 %v495
    %646 = vmatprep.subr.bf16.mxu0 0
    %647 = vmatpush1.bf16.msra.mxu0 %v496
    %648 = vmatprep.subr.bf16.mxu0 0
    %649 = vmatpush1.bf16.msra.mxu0 %v497
    %650 = vmatprep.subr.bf16.mxu0 0
    %651 = vmatpush1.bf16.msra.mxu0 %v498
    %652 = vmatprep.subr.bf16.mxu0 0
    %653 = vmatpush1.bf16.msra.mxu0 %v499
    %654 = vmatprep.subr.bf16.mxu0 0
    %655 = vmatpush1.bf16.msra.mxu0 %v500
    %656 = vmatprep.subr.bf16.mxu0 0
    %657 = vmatpush1.bf16.msra.mxu0 %v501
    %658 = vmatprep.subr.bf16.mxu0 0
    %659 = vmatpush1.bf16.msra.mxu0 %v502
    %660 = vmatprep.subr.bf16.mxu0 0
    %661 = vmatpush1.bf16.msra.mxu0 %v503
    %662 = vmatprep.subr.bf16.mxu0 0
    %663 = vmatpush1.bf16.msra.mxu0 %v504
    %664 = vmatprep.subr.bf16.mxu0 0
    %665 = vmatpush1.bf16.msra.mxu0 %v505
    %666 = vmatprep.mubr.bf16.mxu0 %v83
    %667 = vmatmul.mubr.bf16.gmra.mrb[0].mxu0 %v82
    %v668 = vpop.f32.mrb[0].mxu0
    %v669 = vadd.f32 %v629, %v668
    %v670 = vpop.f32.mrb[0].mxu0
    %v671 = vpop.f32.mrb[0].mxu0
    %v672 = vpop.f32.mrb[0].mxu0
    %673 = vdwg.mxu0
    %v674 = vld [vmem:[%s4] sm:$0x1]
    %v676 = vlaneseq
    %v677 = vshrl.u32 %v676, 7
    %v678 = vsub.s32 0, %v677
    %v679 = vrot.slane %v674, %v678
    %v681 = vadd.f32 %v669, %v679
    %vm682 = vcmask 15360
    %683 = vst.msk [vmem:[%s5] sm:$0xff] %vm682, %v681
    // Predicated region
    $region38: #{tbert_forward.1} parent=1 // pred_check
      _
    $region39: #{tbert_forward.1} parent=1 // pred_check_branch
      %685 = sbr.rel (0) target = $region41
    $region40: #{tbert_forward.1} parent=1 // pred_region
      _
    $region41: #{tbert_forward.1} parent=1 // pred_fallthru
      _
    // Predicated region
    $region42: #{tbert_forward.1} parent=1 // pred_check
      _
    $region43: #{tbert_forward.1} parent=1 // pred_check_branch
      %687 = sbr.rel (0) target = $region45
    $region44: #{tbert_forward.1} parent=1 // pred_region
      _
    $region45: #{tbert_forward.1} parent=1 // pred_fallthru
      _
    %688 = vsyncpa [#allocation3], 1
    %689 = vsyncpa [#allocation5], 1
    %690 = vsyncpa [#allocation8], 1

</llo_original>
